<compile_context>
chip_gen: v7x
topology: tpu7x:2x2x1
jax: 0.10.0
libtpu: 0.0.40
codegen_flags: <defaults>
</compile_context>

<pallas_src>
import jax
import jax.numpy as jnp
from jax.experimental import pallas as pl
from jax.experimental.pallas import tpu as pltpu


def softmask_kernel(x_ref, uh_ref, a1_ref, t1_ref, m2_ref, t2_ref, o_ref):
    """Fused: bilinear x2 upsample -> (conv1x1+BN+ReLU) x2 -> sigmoid.

    x_ref  : (NB, H, C*W)        VMEM   lane-dense input slabs
    uh_ref : (2H, H)             VMEM   row-interpolation matrix
    a1_ref : (C*W, C*2W)         VMEM   kron(W1_folded^T, U_w^T): col-upsample + conv1 mix
    t1_ref : (1, C*2W)           VMEM   folded conv1 shift, repeated per lane
    m2_ref : (C*2W, C*2W)        VMEM   kron(W2_folded^T, I_{2W}): conv2 mix
    t2_ref : (1, C*2W)           VMEM   folded conv2 shift, repeated per lane
    o_ref  : (NB, 2H, C*2W)      VMEM   lane-dense output slabs
    """
    nb = x_ref.shape[0]

    # Constants: loaded once, outside the batch loop (no re-broadcast per image).
    uh = uh_ref[...]
    a1 = a1_ref[...]
    m2 = m2_ref[...]
    t1 = t1_ref[...]
    t2 = t2_ref[...]

    def body(b, carry):
        xb = x_ref[b].astype(jnp.float32)                           # (H, C*W)
        # Row upsample, then fused (column upsample + conv1 + BN1) — 2 matmuls.
        s = jnp.dot(uh, xb, preferred_element_type=jnp.float32)     # (2H, C*W)
        s = jnp.dot(s, a1, preferred_element_type=jnp.float32)      # (2H, C*2W)
        h = jnp.maximum(s + t1, 0.0)                                 # ReLU
        # conv2 + BN2 as one lane-aligned MXU matmul, then ReLU -> sigmoid.
        s2 = jnp.dot(h, m2, preferred_element_type=jnp.float32)     # (2H, C*2W)
        y = jnp.maximum(s2 + t2, 0.0)
        sig = pl.reciprocal(1.0 + jnp.exp(-y), approx=True)          # EUP-only sigmoid
        o_ref[b] = sig.astype(o_ref.dtype)
        return carry

    jax.lax.fori_loop(0, nb, body, 0)


def upsample2x_matrix(n):
    """(2n, n) matrix M such that M @ v is the x2 linear upsample of v
    (half-pixel centers / align_corners=False, edge-clamped)."""
    j = jnp.arange(2 * n)
    src = jnp.clip((j + 0.5) / 2.0 - 0.5, 0.0, float(n - 1))
    i0 = jnp.floor(src).astype(jnp.int32)
    i1 = jnp.minimum(i0 + 1, n - 1)
    frac = src - i0.astype(jnp.float32)
    m = jnp.zeros((2 * n, n), jnp.float32)
    m = m.at[j, i0].add(1.0 - frac)
    m = m.at[j, i1].add(frac)
    return m


def fold_block_params(w, b, scale, shift):
    """Fold conv bias + eval-mode BN into (C_out, C_in) weights + (C_out,) shift."""
    w_f = w * scale[:, None]
    t_f = b * scale + shift
    return w_f.astype(jnp.float32), t_f.astype(jnp.float32)


def _choose_batch_block(N, in_bytes, out_bytes, vmem_limit_bytes):
    """Pick images per grid step: fill VMEM (double-buffered in+out), target
    ~2 MB moved per step, but keep >= 2 grid steps when possible (v7x 2 TCs)."""
    budget = max(vmem_limit_bytes - (4 << 20), 1 << 20)
    nb_vmem = max(1, budget // (2 * (in_bytes + out_bytes)))
    nb_target = max(1, (2 << 20) // (in_bytes + out_bytes))
    nb_mega = max(1, -(-N // 2))          # ceil(N/2): keep grid length >= 2
    return int(max(1, min(nb_vmem, nb_target, nb_mega)))


def softmask_forward(x_nchw, params, *, batch_block=None,
                     out_dtype=jnp.float32, vmem_limit_bytes=32 * 1024 * 1024):
    """x_nchw: (N, C, H, W) with C == ch_out.  Returns (N, C, 2H, 2W) out_dtype."""
    w1, b1, s1, t1, w2, b2, s2, t2 = params
    N, C, H, W = x_nchw.shape
    H2, W2 = 2 * H, 2 * W

    # Fold conv bias + BN, then bake the channel mixes into lane-aligned matrices.
    w1f, t1f = fold_block_params(w1, b1, s1, t1)
    w2f, t2f = fold_block_params(w2, b2, s2, t2)
    uh = upsample2x_matrix(H)                                   # (2H, H)
    uwt = upsample2x_matrix(W).T                                # (W, 2W)
    a1 = jnp.kron(w1f.T, uwt).astype(jnp.float32)               # (C*W, C*2W)
    m2 = jnp.kron(w2f.T, jnp.eye(W2, dtype=jnp.float32))        # (C*2W, C*2W)
    t1r = jnp.repeat(t1f, W2).reshape(1, C * W2)                # (1, C*2W)
    t2r = jnp.repeat(t2f, W2).reshape(1, C * W2)                # (1, C*2W)

    # Lane-dense input slabs: (N, C, H, W) -> (N, H, C, W) -> (N, H, C*W).
    x_in = jnp.transpose(x_nchw, (0, 2, 1, 3)).reshape(N, H, C * W)

    in_bytes = H * C * W * x_in.dtype.itemsize
    out_bytes = H2 * C * W2 * jnp.dtype(out_dtype).itemsize
    if batch_block is None:
        nb = _choose_batch_block(N, in_bytes, out_bytes, vmem_limit_bytes)
    else:
        nb = max(1, min(batch_block, N))

    n_pad = pl.cdiv(N, nb) * nb
    if n_pad != N:
        x_in = jnp.pad(x_in, ((0, n_pad - N), (0, 0), (0, 0)))
    grid = (n_pad // nb,)

    out = pl.pallas_call(
        softmask_kernel,
        out_shape=jax.ShapeDtypeStruct((n_pad, H2, C * W2), out_dtype),
        grid_spec=pltpu.PrefetchScalarGridSpec(
            num_scalar_prefetch=0,
            grid=grid,
            in_specs=[
                pl.BlockSpec((nb, H, C * W), lambda n: (n, 0, 0)),       # image slabs
                pl.BlockSpec((H2, H), lambda n: (0, 0)),                 # U_h
                pl.BlockSpec((C * W, C * W2), lambda n: (0, 0)),         # A1
                pl.BlockSpec((1, C * W2), lambda n: (0, 0)),             # shift 1
                pl.BlockSpec((C * W2, C * W2), lambda n: (0, 0)),        # M2
                pl.BlockSpec((1, C * W2), lambda n: (0, 0)),             # shift 2
            ],
            out_specs=pl.BlockSpec((nb, H2, C * W2), lambda n: (n, 0, 0)),
        ),
        compiler_params=pltpu.CompilerParams(
            dimension_semantics=("parallel",),
            # 32 MiB is safe on every generation (v7x has 64 MiB physical);
            # raise on v5e/v6e (128 MiB) for very large images / batch blocks.
            vmem_limit_bytes=vmem_limit_bytes,
        ),
    )(x_in, uh, a1, t1r, m2, t2r)

    # NCHW re-layout in the wrapper (kernel stores stay lane-dense).
    out = out[:N].reshape(N, H2, C, W2).transpose(0, 2, 1, 3)
    return out


def softmask_reference(x_nchw, params):
    """Pure-JAX reference (independent of the kernel's folding / fusion)."""
    w1, b1, s1, t1, w2, b2, s2, t2 = params
    N, C, H, W = x_nchw.shape
    hp = jax.lax.Precision.HIGHEST
    up = jax.image.resize(x_nchw.astype(jnp.float32), (N, C, 2 * H, 2 * W),
                          method="bilinear")
    z = jnp.einsum("nchw,oc->nohw", up, w1, precision=hp)
    z = jnp.maximum((z + b1[None, :, None, None]) * s1[None, :, None, None]
                    + t1[None, :, None, None], 0.0)
    z = jnp.einsum("nchw,oc->nohw", z, w2, precision=hp)
    z = jnp.maximum((z + b2[None, :, None, None]) * s2[None, :, None, None]
                    + t2[None, :, None, None], 0.0)
    return jax.nn.sigmoid(z)


def make_softmask_params(ch_out, key):
    """Deterministic synthetic parameters (shapes match the PyTorch module)."""
    ks = jax.random.split(key, 12)
    eps = 1e-5

    def one_block(kw, kb, kg, kbe, km, kv):
        # Conv2d(ch_out, ch_out, 1) weight (C_out, C_in, 1, 1) -> (C_out, C_in)
        w = jax.random.normal(kw, (ch_out, ch_out), jnp.float32) * 0.3
        b = jax.random.normal(kb, (ch_out,), jnp.float32) * 0.1
        gamma = 1.0 + 0.1 * jax.random.normal(kg, (ch_out,), jnp.float32)
        beta = 0.1 * jax.random.normal(kbe, (ch_out,), jnp.float32)
        mean = 0.1 * jax.random.normal(km, (ch_out,), jnp.float32)
        var = jnp.abs(jax.random.normal(kv, (ch_out,), jnp.float32)) + 0.5
        scale = gamma / jnp.sqrt(var + eps)          # eval-mode BN scale
        shift = beta - mean * scale                  # eval-mode BN shift
        return w, b, scale, shift

    w1, b1, s1, t1 = one_block(*ks[0:6])
    w2, b2, s2, t2 = one_block(*ks[6:12])
    return (w1, b1, s1, t1, w2, b2, s2, t2)


if __name__ == "__main__":
    key = jax.random.PRNGKey(0)
    k_x, k_p = jax.random.split(key)

    N, C, H, W = 2, 4, 16, 16          # ch_out = 4
    x = jax.random.normal(k_x, (N, C, H, W), jnp.float32)
    params = make_softmask_params(C, k_p)

    out = softmask_forward(x, params)           # float32 output for exact checking
    out = jax.block_until_ready(out)
    assert out.shape == (N, C, 2 * H, 2 * W)

    # (a) the in-kernel separable interpolation matrices reproduce bilinear /
    #     align_corners=False (jax.image.resize) exactly.
    uh = upsample2x_matrix(H)
    uw = upsample2x_matrix(W)
    up_mat = jnp.einsum("ph,nchw,qw->ncpq", uh, x, uw,
                        precision=jax.lax.Precision.HIGHEST)
    up_ref = jax.image.resize(x, (N, C, 2 * H, 2 * W), method="bilinear")
    assert float(jnp.max(jnp.abs(up_mat - up_ref))) < 1e-5

    # (b) end-to-end vs. an independent pure-JAX reference.  Tolerance allows for
    #     reduced-precision f32 MXU passes and the approx-EUP reciprocal in the
    #     sigmoid; genuine bugs show up at >1e-2 on a sigmoid output.
    ref = softmask_reference(x, params)
    err = float(jnp.max(jnp.abs(out.astype(jnp.float32) - ref)))
    assert err < 2e-3, f"max abs err {err}"

    # (c) bf16-output path (recommended default on v6e/v7x: halves store traffic
    #     of this store-bound op).  Looser tolerance covers the bf16 rounding.
    out_bf16 = softmask_forward(x, params, out_dtype=jnp.bfloat16)
    out_bf16 = jax.block_until_ready(out_bf16)
    err_bf16 = float(jnp.max(jnp.abs(out_bf16.astype(jnp.float32) - ref)))
    assert err_bf16 < 1e-2, f"bf16 max abs err {err_bf16}"

    print("KERNEL_OK")
</pallas_src>

<mosaic_0001>
module attributes {stable_mosaic.version = 11 : i64} {
  func.func @softmask_kernel(%arg0: i32, %arg1: memref<1x16x64xf32, #tpu.memory_space<vmem>>, %arg2: memref<32x16xf32, #tpu.memory_space<vmem>>, %arg3: memref<64x128xf32, #tpu.memory_space<vmem>>, %arg4: memref<1x128xf32, #tpu.memory_space<vmem>>, %arg5: memref<128x128xf32, #tpu.memory_space<vmem>>, %arg6: memref<1x128xf32, #tpu.memory_space<vmem>>, %arg7: memref<1x32x128xf32, #tpu.memory_space<vmem>>) attributes {dimension_semantics = [#tpu.dimension_semantics<parallel>], iteration_bounds = array<i64: 2>, scalar_prefetch = 0 : i64, scratch_operands = 0 : i64, tpu.core_type = #tpu.core_type<tc>, window_params = [{transform_indices = @transform_0, window_bounds = array<i64: 1, 16, 64>}, {pipeline_mode = #tpu.pipeline_mode<synchronous>, transform_indices = @transform_1, window_bounds = array<i64: 32, 16>}, {pipeline_mode = #tpu.pipeline_mode<synchronous>, transform_indices = @transform_2, window_bounds = array<i64: 64, 128>}, {pipeline_mode = #tpu.pipeline_mode<synchronous>, transform_indices = @transform_3, window_bounds = array<i64: 1, 128>}, {pipeline_mode = #tpu.pipeline_mode<synchronous>, transform_indices = @transform_4, window_bounds = array<i64: 128, 128>}, {pipeline_mode = #tpu.pipeline_mode<synchronous>, transform_indices = @transform_5, window_bounds = array<i64: 1, 128>}, {transform_indices = @transform_6, window_bounds = array<i64: 1, 32, 128>}]} {
    %c0 = arith.constant 0 : index
    %c0_0 = arith.constant 0 : index
    %0 = vector.load %arg2[%c0, %c0_0] : memref<32x16xf32, #tpu.memory_space<vmem>>, vector<32x16xf32>
    %c0_1 = arith.constant 0 : index
    %c0_2 = arith.constant 0 : index
    %1 = vector.load %arg3[%c0_1, %c0_2] : memref<64x128xf32, #tpu.memory_space<vmem>>, vector<64x128xf32>
    %c0_3 = arith.constant 0 : index
    %c0_4 = arith.constant 0 : index
    %2 = vector.load %arg5[%c0_3, %c0_4] : memref<128x128xf32, #tpu.memory_space<vmem>>, vector<128x128xf32>
    %c0_5 = arith.constant 0 : index
    %c0_6 = arith.constant 0 : index
    %3 = vector.load %arg4[%c0_5, %c0_6] : memref<1x128xf32, #tpu.memory_space<vmem>>, vector<1x128xf32>
    %c0_7 = arith.constant 0 : index
    %c0_8 = arith.constant 0 : index
    %4 = vector.load %arg6[%c0_7, %c0_8] : memref<1x128xf32, #tpu.memory_space<vmem>>, vector<1x128xf32>
    %c0_i32 = arith.constant 0 : i32
    %5 = arith.index_cast %c0_i32 : i32 to index
    %c0_9 = arith.constant 0 : index
    %c0_10 = arith.constant 0 : index
    %6 = vector.load %arg1[%5, %c0_9, %c0_10] : memref<1x16x64xf32, #tpu.memory_space<vmem>>, vector<1x16x64xf32>
    %7 = vector.shape_cast %6 : vector<1x16x64xf32> to vector<16x64xf32>
    %cst = arith.constant dense<0.000000e+00> : vector<32x64xf32>
    %8 = tpu.matmul %0, %7, %cst {dimension_numbers = #tpu.dot_dimension_numbers<[1], [0], [0], [1], [0, 0, 1, 1], [], []>} : vector<32x16xf32>, vector<16x64xf32>, vector<32x64xf32> -> vector<32x64xf32>
    %cst_11 = arith.constant dense<0.000000e+00> : vector<32x128xf32>
    %9 = tpu.matmul %8, %1, %cst_11 {dimension_numbers = #tpu.dot_dimension_numbers<[1], [0], [0], [1], [0, 0, 1, 1], [], []>} : vector<32x64xf32>, vector<64x128xf32>, vector<32x128xf32> -> vector<32x128xf32>
    %10 = vector.broadcast %3 : vector<1x128xf32> to vector<32x128xf32>
    %11 = arith.addf %9, %10 : vector<32x128xf32>
    %cst_12 = arith.constant 0.000000e+00 : f32
    %12 = vector.broadcast %cst_12 : f32 to vector<32x128xf32>
    %13 = arith.maximumf %11, %12 : vector<32x128xf32>
    %cst_13 = arith.constant dense<0.000000e+00> : vector<32x128xf32>
    %14 = tpu.matmul %13, %2, %cst_13 {dimension_numbers = #tpu.dot_dimension_numbers<[1], [0], [0], [1], [0, 0, 1, 1], [], []>} : vector<32x128xf32>, vector<128x128xf32>, vector<32x128xf32> -> vector<32x128xf32>
    %15 = vector.broadcast %4 : vector<1x128xf32> to vector<32x128xf32>
    %16 = arith.addf %14, %15 : vector<32x128xf32>
    %cst_14 = arith.constant 0.000000e+00 : f32
    %17 = vector.broadcast %cst_14 : f32 to vector<32x128xf32>
    %18 = arith.maximumf %16, %17 : vector<32x128xf32>
    %cst_15 = arith.constant 0.000000e+00 : f32
    %19 = vector.broadcast %cst_15 : f32 to vector<32x128xf32>
    %20 = arith.subf %19, %18 : vector<32x128xf32>
    %21 = math.exp %20 : vector<32x128xf32>
    %cst_16 = arith.constant 1.000000e+00 : f32
    %22 = vector.broadcast %cst_16 : f32 to vector<32x128xf32>
    %23 = arith.addf %22, %21 : vector<32x128xf32>
    %24 = tpu.reciprocal %23 {approx = true} : vector<32x128xf32> -> vector<32x128xf32>
    %25 = arith.index_cast %c0_i32 : i32 to index
    %c0_17 = arith.constant 0 : index
    %c0_18 = arith.constant 0 : index
    %26 = vector.load %arg7[%25, %c0_17, %c0_18] : memref<1x32x128xf32, #tpu.memory_space<vmem>>, vector<1x32x128xf32>
    %27 = vector.shape_cast %26 : vector<1x32x128xf32> to vector<32x128xf32>
    %28 = vector.shape_cast %24 : vector<32x128xf32> to vector<1x32x128xf32>
    tpu.vector_store %arg7[%25, %c0_17, %c0_18], %28 {strides = array<i32>} : memref<1x32x128xf32, #tpu.memory_space<vmem>>, vector<1x32x128xf32>,
    %c1_i32 = arith.constant 1 : i32
    return
  }
  func.func @transform_0(%arg0: i32) -> (i32, i32, i32) {
    %c0_i32 = arith.constant 0 : i32
    %c0_i32_0 = arith.constant 0 : i32
    %c0_i32_1 = arith.constant 0 : i32
    return %arg0, %c0_i32, %c0_i32_0 : i32, i32, i32
  }
  func.func @transform_1(%arg0: i32) -> (i32, i32) {
    %c0_i32 = arith.constant 0 : i32
    %c0_i32_0 = arith.constant 0 : i32
    %c0_i32_1 = arith.constant 0 : i32
    return %c0_i32, %c0_i32_0 : i32, i32
  }
  func.func @transform_2(%arg0: i32) -> (i32, i32) {
    %c0_i32 = arith.constant 0 : i32
    %c0_i32_0 = arith.constant 0 : i32
    %c0_i32_1 = arith.constant 0 : i32
    return %c0_i32, %c0_i32_0 : i32, i32
  }
  func.func @transform_3(%arg0: i32) -> (i32, i32) {
    %c0_i32 = arith.constant 0 : i32
    %c0_i32_0 = arith.constant 0 : i32
    %c0_i32_1 = arith.constant 0 : i32
    return %c0_i32, %c0_i32_0 : i32, i32
  }
  func.func @transform_4(%arg0: i32) -> (i32, i32) {
    %c0_i32 = arith.constant 0 : i32
    %c0_i32_0 = arith.constant 0 : i32
    %c0_i32_1 = arith.constant 0 : i32
    return %c0_i32, %c0_i32_0 : i32, i32
  }
  func.func @transform_5(%arg0: i32) -> (i32, i32) {
    %c0_i32 = arith.constant 0 : i32
    %c0_i32_0 = arith.constant 0 : i32
    %c0_i32_1 = arith.constant 0 : i32
    return %c0_i32, %c0_i32_0 : i32, i32
  }
  func.func @transform_6(%arg0: i32) -> (i32, i32, i32) {
    %c0_i32 = arith.constant 0 : i32
    %c0_i32_0 = arith.constant 0 : i32
    %c0_i32_1 = arith.constant 0 : i32
    return %arg0, %c0_i32, %c0_i32_0 : i32, i32, i32
  }
}

</mosaic_0001>

<llo_original>
// kernel: tpu_custom_call.1
$region0: #{tpu_custom_call.1}
  #allocation0 [shape = 'u32[]', space=smem, size = 0x4, offset = 0x4, fixed_abs, tag = 'smem constant byte address 0x4 - core index']
  #allocation1 [shape = 'u32[144,128]{1,0:T(1,128)}', space=vmem, size = 0x12000, scoped, tag = 'internal scratch']
  %s0 = inlined_call_operand.vmem [shape: f32[2,16,64], index: 0, kind: input, shape index: {}]
  %s1 = inlined_call_operand.vmem [shape: f32[32,16], index: 1, kind: input, shape index: {}]
  %s2 = inlined_call_operand.hbm [shape: f32[64,128], index: 2, kind: input, shape index: {}]
  %s3 = inlined_call_operand.vmem [shape: f32[1,128], index: 3, kind: input, shape index: {}]
  %s4 = inlined_call_operand.hbm [shape: f32[128,128], index: 4, kind: input, shape index: {}]
  %s5 = inlined_call_operand.vmem [shape: f32[1,128], index: 5, kind: input, shape index: {}]
  %s6 = inlined_call_operand.hbm [shape: f32[2,32,128], index: 6, kind: output, shape index: {}]
  %s7 = sld [smem:[#allocation0]]
  $region65: #{tpu_custom_call.1} parent=0
    _
  %s9 = ssub.s32 1, %s7
  %s10 = scalar_select 0, %s9, %s7
  $region1: #{tpu_custom_call.1} parent=0
    #allocation2 [shape = 'u8[32768]{0}', space=vmem, size = 0x8000, scoped, tag = 'input window, operand 2, single buffered']
    #allocation3 [shape = 's32[2]{0}', space=sflag, size = 0x8, scoped, tag = 'scoped memory for tpu_custom_call.1']
    #allocation4 [shape = 's32[2]{0}', space=sflag, size = 0x8, scoped, tag = 'scoped memory for tpu_custom_call.1']
    #allocation5 [shape = 'u8[65536]{0}', space=vmem, size = 0x10000, scoped, tag = 'input window, operand 4, single buffered']
    #allocation6 [shape = 's32[1]{0}', space=sflag, size = 0x4, scoped, tag = 'scoped memory for tpu_custom_call.1']
    #allocation7 [shape = 'u8[32768]{0}', space=vmem, size = 0x8000, scoped, tag = 'output window, operand 0']
    %11 = vsyncpa [#allocation3], 0
    %12 = vsyncpa [#allocation6], 0
    %13 = vsyncpa [#allocation4], 0
    %s14 = scalar_lea.sflag [#allocation4], 1
    %15 = vsyncpa %s14, 0
    loop: start=0, step=1, limit=4
    $region2: #{tpu_custom_call.1} parent=1 // loop_pre_header
      _
    $region3: #{tpu_custom_call.1} parent=1 // loop_header
      %s17 = sphi 0, %s21
      %p18 = scmp.ge.s32.totalorder %s17, 4
      %s27 = sphi 0, %s29
      %s30 = sphi 0, %s27
      %s31 = sphi 0, %s30
      %s47 = sphi 0, %s31
      %s51 = sphi 0, %s51
      %s53 = sphi 0, %s51
      %s54 = sphi 0, %s53
      %s68 = sphi 0, %s54
      %s72 = sphi 0, %s72
      %s74 = sphi 0, %s72
      %s75 = sphi 0, %s74
      %s89 = sphi 0, %s75
      %s93 = sphi 0, %s93
      %s95 = sphi 0, %s93
      %s96 = sphi 0, %s95
      %s110 = sphi 0, %s96
      %s114 = sphi 0, %s114
      %s116 = sphi 0, %s114
      %s117 = sphi 0, %s116
      %s131 = sphi 0, %s117
      %s135 = sphi 0, %s135
      %s137 = sphi 0, %s135
      %s138 = sphi 0, %s137
      %s152 = sphi 0, %s138
      %s158 = sphi 0, %s160
      %s161 = sphi 0, %s158
      %s162 = sphi 0, %s161
      %s178 = sphi 0, %s162
    $region4: #{tpu_custom_call.1} parent=1 // loop_header_branch
      %20 = sbr.rel (%p18) target = $region8
    $region5: #{tpu_custom_call.1} parent=1 // loop_body
      %s22 = ssub.s32 %s17, 1
      %s23 = ssub.s32 %s17, 2
      %s24 = sadd.s32 %s17, 1
      %s25 = ssub.s32 %s17, %s24
      %p26 = scmp.eq.s32.totalorder %s25, 0
      %s28 = sadd.s32 %s27, 1
      %s29 = scalar_select %p26, %s27, %s28
      %p32 = pneg %p26
      %p33 = scmp.eq.s32.totalorder %s17, 1
      %p34 = por %p32, %p33
      %p35 = scmp.ne.s32.totalorder %s27, %s30
      %p36 = scmp.eq.s32.totalorder %s17, 0
      %p37 = por %p35, %p36
      %p38 = scmp.ne.s32.totalorder %s27, %s30
      %p39 = scmp.eq.s32.totalorder %s22, 1
      %p40 = por %p38, %p39
      %p41 = scmp.ne.s32.totalorder %s30, %s31
      %p42 = scmp.eq.s32.totalorder %s22, 0
      %p43 = por %p41, %p42
      %p44 = scmp.ne.s32.totalorder %s30, %s31
      %p45 = scmp.eq.s32.totalorder %s23, 1
      %p46 = por %p44, %p45
      %p48 = scmp.ne.s32.totalorder %s31, %s47
      %p49 = scmp.eq.s32.totalorder %s23, 0
      %p50 = por %p48, %p49
      %s52 = sadd.s32 %s51, 1
      %p55 = scmp.eq.s32.totalorder %s17, 1
      %p56 = scmp.ne.s32.totalorder %s51, %s53
      %p57 = scmp.eq.s32.totalorder %s17, 0
      %p58 = por %p56, %p57
      %p59 = scmp.ne.s32.totalorder %s51, %s53
      %p60 = scmp.eq.s32.totalorder %s22, 1
      %p61 = por %p59, %p60
      %p62 = scmp.ne.s32.totalorder %s53, %s54
      %p63 = scmp.eq.s32.totalorder %s22, 0
      %p64 = por %p62, %p63
      %p65 = scmp.ne.s32.totalorder %s53, %s54
      %p66 = scmp.eq.s32.totalorder %s23, 1
      %p67 = por %p65, %p66
      %p69 = scmp.ne.s32.totalorder %s54, %s68
      %p70 = scmp.eq.s32.totalorder %s23, 0
      %p71 = por %p69, %p70
      %s73 = sadd.s32 %s72, 1
      %p76 = scmp.eq.s32.totalorder %s17, 1
      %p77 = scmp.ne.s32.totalorder %s72, %s74
      %p78 = scmp.eq.s32.totalorder %s17, 0
      %p79 = por %p77, %p78
      %p80 = scmp.ne.s32.totalorder %s72, %s74
      %p81 = scmp.eq.s32.totalorder %s22, 1
      %p82 = por %p80, %p81
      %p83 = scmp.ne.s32.totalorder %s74, %s75
      %p84 = scmp.eq.s32.totalorder %s22, 0
      %p85 = por %p83, %p84
      %p86 = scmp.ne.s32.totalorder %s74, %s75
      %p87 = scmp.eq.s32.totalorder %s23, 1
      %p88 = por %p86, %p87
      %p90 = scmp.ne.s32.totalorder %s75, %s89
      %p91 = scmp.eq.s32.totalorder %s23, 0
      %p92 = por %p90, %p91
      %s94 = sadd.s32 %s93, 1
      %p97 = scmp.eq.s32.totalorder %s17, 1
      %p98 = scmp.ne.s32.totalorder %s93, %s95
      %p99 = scmp.eq.s32.totalorder %s17, 0
      %p100 = por %p98, %p99
      %p101 = scmp.ne.s32.totalorder %s93, %s95
      %p102 = scmp.eq.s32.totalorder %s22, 1
      %p103 = por %p101, %p102
      %p104 = scmp.ne.s32.totalorder %s95, %s96
      %p105 = scmp.eq.s32.totalorder %s22, 0
      %p106 = por %p104, %p105
      %p107 = scmp.ne.s32.totalorder %s95, %s96
      %p108 = scmp.eq.s32.totalorder %s23, 1
      %p109 = por %p107, %p108
      %p111 = scmp.ne.s32.totalorder %s96, %s110
      %p112 = scmp.eq.s32.totalorder %s23, 0
      %p113 = por %p111, %p112
      %s115 = sadd.s32 %s114, 1
      %p118 = scmp.eq.s32.totalorder %s17, 1
      %p119 = scmp.ne.s32.totalorder %s114, %s116
      %p120 = scmp.eq.s32.totalorder %s17, 0
      %p121 = por %p119, %p120
      %p122 = scmp.ne.s32.totalorder %s114, %s116
      %p123 = scmp.eq.s32.totalorder %s22, 1
      %p124 = por %p122, %p123
      %p125 = scmp.ne.s32.totalorder %s116, %s117
      %p126 = scmp.eq.s32.totalorder %s22, 0
      %p127 = por %p125, %p126
      %p128 = scmp.ne.s32.totalorder %s116, %s117
      %p129 = scmp.eq.s32.totalorder %s23, 1
      %p130 = por %p128, %p129
      %p132 = scmp.ne.s32.totalorder %s117, %s131
      %p133 = scmp.eq.s32.totalorder %s23, 0
      %p134 = por %p132, %p133
      %s136 = sadd.s32 %s135, 1
      %p139 = scmp.eq.s32.totalorder %s17, 1
      %p140 = scmp.ne.s32.totalorder %s135, %s137
      %p141 = scmp.eq.s32.totalorder %s17, 0
      %p142 = por %p140, %p141
      %p143 = scmp.ne.s32.totalorder %s135, %s137
      %p144 = scmp.eq.s32.totalorder %s22, 1
      %p145 = por %p143, %p144
      %p146 = scmp.ne.s32.totalorder %s137, %s138
      %p147 = scmp.eq.s32.totalorder %s22, 0
      %p148 = por %p146, %p147
      %p149 = scmp.ne.s32.totalorder %s137, %s138
      %p150 = scmp.eq.s32.totalorder %s23, 1
      %p151 = por %p149, %p150
      %p153 = scmp.ne.s32.totalorder %s138, %s152
      %p154 = scmp.eq.s32.totalorder %s23, 0
      %p155 = por %p153, %p154
      %s156 = ssub.s32 %s17, %s24
      %p157 = scmp.eq.s32.totalorder %s156, 0
      %s159 = sadd.s32 %s158, 1
      %s160 = scalar_select %p157, %s158, %s159
      %p163 = pneg %p157
      %p164 = scmp.eq.s32.totalorder %s17, 1
      %p165 = por %p163, %p164
      %p166 = scmp.ne.s32.totalorder %s158, %s161
      %p167 = scmp.eq.s32.totalorder %s17, 0
      %p168 = por %p166, %p167
      %p169 = scmp.ne.s32.totalorder %s158, %s161
      %p170 = scmp.eq.s32.totalorder %s22, 1
      %p171 = por %p169, %p170
      %p172 = scmp.ne.s32.totalorder %s161, %s162
      %p173 = scmp.eq.s32.totalorder %s22, 0
      %p174 = por %p172, %p173
      %p175 = scmp.ne.s32.totalorder %s161, %s162
      %p176 = scmp.eq.s32.totalorder %s23, 1
      %p177 = por %p175, %p176
      %p179 = scmp.ne.s32.totalorder %s162, %s178
      %p180 = scmp.eq.s32.totalorder %s23, 0
      %p181 = por %p179, %p180
      %p182 = scmp.le.s32.totalorder 1, %s17
      %p183 = scmp.lt.s32.totalorder %s17, 3
      %p184 = pnand %p182, %p183
      %p185 = pneg %p184
      // Predicated region
      $region9: #{tpu_custom_call.1} parent=5 // pred_check
        _
      $region10: #{tpu_custom_call.1} parent=5 // pred_check_branch
        %187 = sbr.rel (%p184) target = $region12
      $region11: #{tpu_custom_call.1} parent=5 // pred_region
        %s188 = ssub.s32 %s17, 1
        // Predicated region
        $region13: #{tpu_custom_call.1} parent=11 // pred_check
          %p189 = pneg %p64
        $region14: #{tpu_custom_call.1} parent=11 // pred_check_branch
          %191 = sbr.rel (%p189) target = $region16
        $region15: #{tpu_custom_call.1} parent=11 // pred_region
          _
        $region16: #{tpu_custom_call.1} parent=11 // pred_fallthru
          _
        // Predicated region
        $region17: #{tpu_custom_call.1} parent=11 // pred_check
          %p192 = pneg %p85
        $region18: #{tpu_custom_call.1} parent=11 // pred_check_branch
          %194 = sbr.rel (%p192) target = $region20
        $region19: #{tpu_custom_call.1} parent=11 // pred_region
          %s196 = ssub.s32 1024, 1024
          %197 = vsyncadd [#allocation3], %s196
          %s198 = sshll.u32 [#allocation2], 4
          %s199 = int_to_ptr.vmem [resolvable:$true] %s198
          %204 = dma.hbm_to_vmem [thread:$0]  %s2, 1024, %s199, [#allocation3], 128, 128, 8
        $region20: #{tpu_custom_call.1} parent=11 // pred_fallthru
          _
        // Predicated region
        $region21: #{tpu_custom_call.1} parent=11 // pred_check
          %p205 = pneg %p106
        $region22: #{tpu_custom_call.1} parent=11 // pred_check_branch
          %207 = sbr.rel (%p205) target = $region24
        $region23: #{tpu_custom_call.1} parent=11 // pred_region
          _
        $region24: #{tpu_custom_call.1} parent=11 // pred_fallthru
          _
        // Predicated region
        $region25: #{tpu_custom_call.1} parent=11 // pred_check
          %p208 = pneg %p127
        $region26: #{tpu_custom_call.1} parent=11 // pred_check_branch
          %210 = sbr.rel (%p208) target = $region28
        $region27: #{tpu_custom_call.1} parent=11 // pred_region
          %s212 = ssub.s32 2048, 2048
          %213 = vsyncadd [#allocation6], %s212
          %s214 = sshll.u32 [#allocation5], 4
          %s215 = int_to_ptr.vmem [resolvable:$true] %s214
          %220 = dma.hbm_to_vmem [thread:$0]  %s4, 2048, %s215, [#allocation6], 128, 128, 8
        $region28: #{tpu_custom_call.1} parent=11 // pred_fallthru
          _
        // Predicated region
        $region29: #{tpu_custom_call.1} parent=11 // pred_check
          %p221 = pneg %p148
        $region30: #{tpu_custom_call.1} parent=11 // pred_check_branch
          %223 = sbr.rel (%p221) target = $region32
        $region31: #{tpu_custom_call.1} parent=11 // pred_region
          _
        $region32: #{tpu_custom_call.1} parent=11 // pred_fallthru
          _
      $region12: #{tpu_custom_call.1} parent=5 // pred_fallthru
        _
      %p224 = scmp.lt.s32.totalorder %s17, 2
      // Predicated region
      $region33: #{tpu_custom_call.1} parent=5 // pred_check
        %p225 = pneg %p224
      $region34: #{tpu_custom_call.1} parent=5 // pred_check_branch
        %227 = sbr.rel (%p225) target = $region36
      $region35: #{tpu_custom_call.1} parent=5 // pred_region
        // Predicated region
        $region37: #{tpu_custom_call.1} parent=35 // pred_check
          %p228 = pneg %p37
        $region38: #{tpu_custom_call.1} parent=35 // pred_check_branch
          %230 = sbr.rel (%p228) target = $region40
        $region39: #{tpu_custom_call.1} parent=35 // pred_region
          %p231 = scmp.lt.s32.totalorder %s17, 1
          %s232 = scalar_select %p231, %s17, 1
          %s233 = smul.addr %s232, 2
          %s234 = smul.addr %s233, 8
          %s235 = scalar_lea.vmem %s0, %s234
        $region40: #{tpu_custom_call.1} parent=35 // pred_fallthru
          _
      $region36: #{tpu_custom_call.1} parent=5 // pred_fallthru
        _
      %p236 = scmp.le.s32.totalorder 1, %s17
      %p237 = scmp.lt.s32.totalorder %s17, 3
      %p238 = pnand %p236, %p237
      %p239 = pneg %p238
      // Predicated region
      $region41: #{tpu_custom_call.1} parent=5 // pred_check
        _
      $region42: #{tpu_custom_call.1} parent=5 // pred_check_branch
        %241 = sbr.rel (%p238) target = $region44
      $region43: #{tpu_custom_call.1} parent=5 // pred_region
        %s242 = ssub.s32 %s17, 1
        // Predicated region
        $region45: #{tpu_custom_call.1} parent=43 // pred_check
          %p243 = pneg %p85
        $region46: #{tpu_custom_call.1} parent=43 // pred_check_branch
          %245 = sbr.rel (%p243) target = $region48
        $region47: #{tpu_custom_call.1} parent=43 // pred_region
          %246 = dma.done [#allocation3], 1024
        $region48: #{tpu_custom_call.1} parent=43 // pred_fallthru
          _
        // Predicated region
        $region49: #{tpu_custom_call.1} parent=43 // pred_check
          %p247 = pneg %p127
        $region50: #{tpu_custom_call.1} parent=43 // pred_check_branch
          %249 = sbr.rel (%p247) target = $region52
        $region51: #{tpu_custom_call.1} parent=43 // pred_region
          %250 = dma.done [#allocation6], 2048
        $region52: #{tpu_custom_call.1} parent=43 // pred_fallthru
          _
        %p251 = scmp.lt.s32.totalorder %s22, 1
        %s252 = scalar_select %p251, %s22, 1
        %s253 = smul.addr %s252, 2
        %s254 = smul.addr %s253, 8
        %s255 = scalar_lea.vmem %s0, %s254
        %p256 = pneg %p43
        %p257 = pneg %p40
        %p258 = pneg %p64
        %p259 = pneg %p61
        %p260 = pneg %p85
        %p261 = pneg %p82
        %p262 = pneg %p106
        %p263 = pneg %p103
        %p264 = pneg %p127
        %p265 = pneg %p124
        %p266 = pneg %p148
        %p267 = pneg %p145
        %p268 = pneg %p174
        %p269 = pneg %p171
        %s270 = sand.u32 %s161, 1
        %s271 = scalar_lea.sflag [#allocation4], %s270
        %s272 = sand.u32 %s161, 1
        %s273 = smul.addr %s272, 32
        %s274 = scalar_lea.vmem [#allocation7], %s273
        %p275 = scmp.lt.s32.totalorder %s22, 1
        %s276 = scalar_select %p275, %s22, 1
        %s277 = smul.addr %s276, 2
        %s278 = smul.addr %s277, 8
        %s279 = scalar_lea.vmem %s0, %s278
        %v280 = vld [vmem:[%s1] sm:$0xff]
        %v281 = vld [vmem:[%s1 + $0x8] sm:$0xff]
        %v282 = vld [vmem:[%s1 + $0x10] sm:$0xff]
        %v283 = vld [vmem:[%s1 + $0x18] sm:$0xff]
        %v284 = vld [vmem:[#allocation2] sm:$0xff]
        %v285 = vld [vmem:[#allocation2 + $0x8] sm:$0xff]
        %v286 = vld [vmem:[#allocation2 + $0x10] sm:$0xff]
        %v287 = vld [vmem:[#allocation2 + $0x18] sm:$0xff]
        %v288 = vld [vmem:[#allocation2 + $0x20] sm:$0xff]
        %v289 = vld [vmem:[#allocation2 + $0x28] sm:$0xff]
        %v290 = vld [vmem:[#allocation2 + $0x30] sm:$0xff]
        %v291 = vld [vmem:[#allocation2 + $0x38] sm:$0xff]
        %v292 = vld [vmem:[#allocation5] sm:$0xff]
        %v293 = vld [vmem:[#allocation5 + $0x8] sm:$0xff]
        %v294 = vld [vmem:[#allocation5 + $0x10] sm:$0xff]
        %v295 = vld [vmem:[#allocation5 + $0x18] sm:$0xff]
        %v296 = vld [vmem:[#allocation5 + $0x20] sm:$0xff]
        %v297 = vld [vmem:[#allocation5 + $0x28] sm:$0xff]
        %v298 = vld [vmem:[#allocation5 + $0x30] sm:$0xff]
        %v299 = vld [vmem:[#allocation5 + $0x38] sm:$0xff]
        %v300 = vld [vmem:[#allocation5 + $0x40] sm:$0xff]
        %v301 = vld [vmem:[#allocation5 + $0x48] sm:$0xff]
        %v302 = vld [vmem:[#allocation5 + $0x50] sm:$0xff]
        %v303 = vld [vmem:[#allocation5 + $0x58] sm:$0xff]
        %v304 = vld [vmem:[#allocation5 + $0x60] sm:$0xff]
        %v305 = vld [vmem:[#allocation5 + $0x68] sm:$0xff]
        %v306 = vld [vmem:[#allocation5 + $0x70] sm:$0xff]
        %v307 = vld [vmem:[#allocation5 + $0x78] sm:$0xff]
        %v308 = vld [vmem:[%s3] sm:$0x1]
        %v309 = vld [vmem:[%s5] sm:$0x1]
        %v310 = vld [vmem:[%s279] sm:$0xff]
        %v311 = vld [vmem:[%s279 + $0x8] sm:$0xff]
        %vm312 = vcmask 130048
        %v314 = vsel %vm312, %v280, 0
        %v317 = vsel %vm312, %v281, 0
        %v320 = vsel %vm312, %v282, 0
        %v323 = vsel %vm312, %v283, 0
        %325 = vmatprep.subr.mxu0 0.0
        %326 = vmatpush1.msra.mxu0 %v310
        %327 = vmatprep.subr.mxu0 0.0
        %328 = vmatpush1.msra.mxu0 %v311
        %329 = vmatprep.subr.mxu0 0.0
        %330 = vmatpush1.msra.mxu0 0.0
        %331 = vmatprep.subr.mxu0 0.0
        %332 = vmatpush1.msra.mxu0 0.0
        %333 = vmatprep.subr.mxu0 0.0
        %334 = vmatpush1.msra.mxu0 0.0
        %335 = vmatprep.subr.mxu0 0.0
        %336 = vmatpush1.msra.mxu0 0.0
        %337 = vmatprep.subr.mxu0 0.0
        %338 = vmatpush1.msra.mxu0 0.0
        %339 = vmatprep.subr.mxu0 0.0
        %340 = vmatpush1.msra.mxu0 0.0
        %341 = vmatprep.subr.mxu0 0.0
        %342 = vmatpush1.msra.mxu0 0.0
        %343 = vmatprep.subr.mxu0 0.0
        %344 = vmatpush1.msra.mxu0 0.0
        %345 = vmatprep.subr.mxu0 0.0
        %346 = vmatpush1.msra.mxu0 0.0
        %347 = vmatprep.subr.mxu0 0.0
        %348 = vmatpush1.msra.mxu0 0.0
        %349 = vmatprep.subr.mxu0 0.0
        %350 = vmatpush1.msra.mxu0 0.0
        %351 = vmatprep.subr.mxu0 0.0
        %352 = vmatpush1.msra.mxu0 0.0
        %353 = vmatprep.subr.mxu0 0.0
        %354 = vmatpush1.msra.mxu0 0.0
        %355 = vmatprep.subr.mxu0 0.0
        %356 = vmatpush1.msra.mxu0 0.0
        %357 = vmatprep.subr.mxu0 0.0
        %358 = vmatpush1.msra.mxu0 0.0
        %359 = vmatprep.subr.mxu0 0.0
        %360 = vmatpush1.msra.mxu0 0.0
        %361 = vmatprep.subr.mxu0 0.0
        %362 = vmatpush1.msra.mxu0 0.0
        %363 = vmatprep.subr.mxu0 0.0
        %364 = vmatpush1.msra.mxu0 0.0
        %365 = vmatprep.subr.mxu0 0.0
        %366 = vmatpush1.msra.mxu0 0.0
        %367 = vmatprep.subr.mxu0 0.0
        %368 = vmatpush1.msra.mxu0 0.0
        %369 = vmatprep.subr.mxu0 0.0
        %370 = vmatpush1.msra.mxu0 0.0
        %371 = vmatprep.subr.mxu0 0.0
        %372 = vmatpush1.msra.mxu0 0.0
        %373 = vmatprep.subr.mxu0 0.0
        %374 = vmatpush1.msra.mxu0 0.0
        %375 = vmatprep.subr.mxu0 0.0
        %376 = vmatpush1.msra.mxu0 0.0
        %377 = vmatprep.subr.mxu0 0.0
        %378 = vmatpush1.msra.mxu0 0.0
        %379 = vmatprep.subr.mxu0 0.0
        %380 = vmatpush1.msra.mxu0 0.0
        %381 = vmatprep.subr.mxu0 0.0
        %382 = vmatpush1.msra.mxu0 0.0
        %383 = vmatprep.subr.mxu0 0.0
        %384 = vmatpush1.msra.mxu0 0.0
        %385 = vmatprep.subr.mxu0 0.0
        %386 = vmatpush1.msra.mxu0 0.0
        %387 = vmatprep.subr.mxu0 0.0
        %388 = vmatpush1.msra.mxu0 0.0
        %389 = vmatprep.mubr.f32.mxu0 0.0
        %390 = vmatmul.mubr.f32.gmra.mrb[0].mxu0 %v314
        %v391 = vpop.f32.mrb[0].mxu0
        %v392 = vadd.f32 0.0, %v391
        %v393 = vpop.f32.mrb[0].mxu0
        %394 = vmatprep.mubr.f32.mxu0 0.0
        %395 = vmatmul.mubr.f32.gmra.mrb[0].mxu0 %v317
        %v396 = vpop.f32.mrb[0].mxu0
        %v397 = vadd.f32 0.0, %v396
        %v398 = vpop.f32.mrb[0].mxu0
        %399 = vmatprep.mubr.f32.mxu0 0.0
        %400 = vmatmul.mubr.f32.gmra.mrb[0].mxu0 %v320
        %v401 = vpop.f32.mrb[0].mxu0
        %v402 = vadd.f32 0.0, %v401
        %v403 = vpop.f32.mrb[0].mxu0
        %404 = vmatprep.mubr.f32.mxu0 0.0
        %405 = vmatmul.mubr.f32.gmra.mrb[0].mxu0 %v323
        %v406 = vpop.f32.mrb[0].mxu0
        %v407 = vadd.f32 0.0, %v406
        %v408 = vpop.f32.mrb[0].mxu0
        %409 = vdwg.mxu0
        %v411 = vlaneseq
        %v412 = vshrl.u32 %v411, 7
        %v413 = vsub.s32 0, %v412
        %v414 = vrot.slane %v308, %v413
        %vm416 = vcmask 523264
        %v418 = vsel %vm416, %v392, 0
        %v421 = vsel %vm416, %v397, 0
        %v424 = vsel %vm416, %v402, 0
        %v427 = vsel %vm416, %v407, 0
        %429 = vmatprep.subr.mxu0 0.0
        %430 = vmatpush1.msra.mxu0 %v284
        %431 = vmatprep.subr.mxu0 0.0
        %432 = vmatpush1.msra.mxu0 %v285
        %433 = vmatprep.subr.mxu0 0.0
        %434 = vmatpush1.msra.mxu0 %v286
        %435 = vmatprep.subr.mxu0 0.0
        %436 = vmatpush1.msra.mxu0 %v287
        %437 = vmatprep.subr.mxu0 0.0
        %438 = vmatpush1.msra.mxu0 %v288
        %439 = vmatprep.subr.mxu0 0.0
        %440 = vmatpush1.msra.mxu0 %v289
        %441 = vmatprep.subr.mxu0 0.0
        %442 = vmatpush1.msra.mxu0 %v290
        %443 = vmatprep.subr.mxu0 0.0
        %444 = vmatpush1.msra.mxu0 %v291
        %445 = vmatprep.subr.mxu0 0.0
        %446 = vmatpush1.msra.mxu0 0.0
        %447 = vmatprep.subr.mxu0 0.0
        %448 = vmatpush1.msra.mxu0 0.0
        %449 = vmatprep.subr.mxu0 0.0
        %450 = vmatpush1.msra.mxu0 0.0
        %451 = vmatprep.subr.mxu0 0.0
        %452 = vmatpush1.msra.mxu0 0.0
        %453 = vmatprep.subr.mxu0 0.0
        %454 = vmatpush1.msra.mxu0 0.0
        %455 = vmatprep.subr.mxu0 0.0
        %456 = vmatpush1.msra.mxu0 0.0
        %457 = vmatprep.subr.mxu0 0.0
        %458 = vmatpush1.msra.mxu0 0.0
        %459 = vmatprep.subr.mxu0 0.0
        %460 = vmatpush1.msra.mxu0 0.0
        %461 = vmatprep.subr.mxu0 0.0
        %462 = vmatpush1.msra.mxu0 0.0
        %463 = vmatprep.subr.mxu0 0.0
        %464 = vmatpush1.msra.mxu0 0.0
        %465 = vmatprep.subr.mxu0 0.0
        %466 = vmatpush1.msra.mxu0 0.0
        %467 = vmatprep.subr.mxu0 0.0
        %468 = vmatpush1.msra.mxu0 0.0
        %469 = vmatprep.subr.mxu0 0.0
        %470 = vmatpush1.msra.mxu0 0.0
        %471 = vmatprep.subr.mxu0 0.0
        %472 = vmatpush1.msra.mxu0 0.0
        %473 = vmatprep.subr.mxu0 0.0
        %474 = vmatpush1.msra.mxu0 0.0
        %475 = vmatprep.subr.mxu0 0.0
        %476 = vmatpush1.msra.mxu0 0.0
        %477 = vmatprep.subr.mxu0 0.0
        %478 = vmatpush1.msra.mxu0 0.0
        %479 = vmatprep.subr.mxu0 0.0
        %480 = vmatpush1.msra.mxu0 0.0
        %481 = vmatprep.subr.mxu0 0.0
        %482 = vmatpush1.msra.mxu0 0.0
        %483 = vmatprep.subr.mxu0 0.0
        %484 = vmatpush1.msra.mxu0 0.0
        %485 = vmatprep.subr.mxu0 0.0
        %486 = vmatpush1.msra.mxu0 0.0
        %487 = vmatprep.subr.mxu0 0.0
        %488 = vmatpush1.msra.mxu0 0.0
        %489 = vmatprep.subr.mxu0 0.0
        %490 = vmatpush1.msra.mxu0 0.0
        %491 = vmatprep.subr.mxu0 0.0
        %492 = vmatpush1.msra.mxu0 0.0
        %493 = vmatprep.mubr.f32.mxu0 0.0
        %494 = vmatmul.mubr.f32.gmra.mrb[0].mxu0 %v418
        %v495 = vpop.f32.mrb[0].mxu0
        %v496 = vadd.f32 %v414, %v495
        %v497 = vpop.f32.mrb[0].mxu0
        %498 = vmatprep.mubr.f32.mxu0 0.0
        %499 = vmatmul.mubr.f32.gmra.mrb[0].mxu0 %v421
        %v500 = vpop.f32.mrb[0].mxu0
        %v501 = vadd.f32 %v414, %v500
        %v502 = vpop.f32.mrb[0].mxu0
        %503 = vmatprep.mubr.f32.mxu0 0.0
        %504 = vmatmul.mubr.f32.gmra.mrb[0].mxu0 %v424
        %v505 = vpop.f32.mrb[0].mxu0
        %v506 = vadd.f32 %v414, %v505
        %v507 = vpop.f32.mrb[0].mxu0
        %508 = vmatprep.mubr.f32.mxu0 0.0
        %509 = vmatmul.mubr.f32.gmra.mrb[0].mxu0 %v427
        %v510 = vpop.f32.mrb[0].mxu0
        %v511 = vadd.f32 %v414, %v510
        %v512 = vpop.f32.mrb[0].mxu0
        %513 = vdwg.mxu0
        %v514 = vmax.f32 %v496, 0.0
        %v515 = vmax.f32 %v501, 0.0
        %v516 = vmax.f32 %v506, 0.0
        %v517 = vmax.f32 %v511, 0.0
        %v519 = vlaneseq
        %v520 = vshrl.u32 %v519, 7
        %v521 = vsub.s32 0, %v520
        %v522 = vrot.slane %v309, %v521
        %524 = vmatprep.subr.mxu0 0.0
        %525 = vmatpush1.msra.mxu0 %v292
        %526 = vmatprep.subr.mxu0 0.0
        %527 = vmatpush1.msra.mxu0 %v293
        %528 = vmatprep.subr.mxu0 0.0
        %529 = vmatpush1.msra.mxu0 %v294
        %530 = vmatprep.subr.mxu0 0.0
        %531 = vmatpush1.msra.mxu0 %v295
        %532 = vmatprep.subr.mxu0 0.0
        %533 = vmatpush1.msra.mxu0 %v296
        %534 = vmatprep.subr.mxu0 0.0
        %535 = vmatpush1.msra.mxu0 %v297
        %536 = vmatprep.subr.mxu0 0.0
        %537 = vmatpush1.msra.mxu0 %v298
        %538 = vmatprep.subr.mxu0 0.0
        %539 = vmatpush1.msra.mxu0 %v299
        %540 = vmatprep.subr.mxu0 0.0
        %541 = vmatpush1.msra.mxu0 %v300
        %542 = vmatprep.subr.mxu0 0.0
        %543 = vmatpush1.msra.mxu0 %v301
        %544 = vmatprep.subr.mxu0 0.0
        %545 = vmatpush1.msra.mxu0 %v302
        %546 = vmatprep.subr.mxu0 0.0
        %547 = vmatpush1.msra.mxu0 %v303
        %548 = vmatprep.subr.mxu0 0.0
        %549 = vmatpush1.msra.mxu0 %v304
        %550 = vmatprep.subr.mxu0 0.0
        %551 = vmatpush1.msra.mxu0 %v305
        %552 = vmatprep.subr.mxu0 0.0
        %553 = vmatpush1.msra.mxu0 %v306
        %554 = vmatprep.subr.mxu0 0.0
        %555 = vmatpush1.msra.mxu0 %v307
        %556 = vmatprep.subr.mxu0 0.0
        %557 = vmatpush1.msra.mxu0 0.0
        %558 = vmatprep.subr.mxu0 0.0
        %559 = vmatpush1.msra.mxu0 0.0
        %560 = vmatprep.subr.mxu0 0.0
        %561 = vmatpush1.msra.mxu0 0.0
        %562 = vmatprep.subr.mxu0 0.0
        %563 = vmatpush1.msra.mxu0 0.0
        %564 = vmatprep.subr.mxu0 0.0
        %565 = vmatpush1.msra.mxu0 0.0
        %566 = vmatprep.subr.mxu0 0.0
        %567 = vmatpush1.msra.mxu0 0.0
        %568 = vmatprep.subr.mxu0 0.0
        %569 = vmatpush1.msra.mxu0 0.0
        %570 = vmatprep.subr.mxu0 0.0
        %571 = vmatpush1.msra.mxu0 0.0
        %572 = vmatprep.subr.mxu0 0.0
        %573 = vmatpush1.msra.mxu0 0.0
        %574 = vmatprep.subr.mxu0 0.0
        %575 = vmatpush1.msra.mxu0 0.0
        %576 = vmatprep.subr.mxu0 0.0
        %577 = vmatpush1.msra.mxu0 0.0
        %578 = vmatprep.subr.mxu0 0.0
        %579 = vmatpush1.msra.mxu0 0.0
        %580 = vmatprep.subr.mxu0 0.0
        %581 = vmatpush1.msra.mxu0 0.0
        %582 = vmatprep.subr.mxu0 0.0
        %583 = vmatpush1.msra.mxu0 0.0
        %584 = vmatprep.subr.mxu0 0.0
        %585 = vmatpush1.msra.mxu0 0.0
        %586 = vmatprep.subr.mxu0 0.0
        %587 = vmatpush1.msra.mxu0 0.0
        %588 = vmatprep.mubr.f32.mxu0 0.0
        %589 = vmatmul.mubr.f32.gmra.mrb[0].mxu0 %v514
        %v590 = vpop.f32.mrb[0].mxu0
        %v591 = vadd.f32 %v522, %v590
        %v592 = vpop.f32.mrb[0].mxu0
        %593 = vmatprep.mubr.f32.mxu0 0.0
        %594 = vmatmul.mubr.f32.gmra.mrb[0].mxu0 %v515
        %v595 = vpop.f32.mrb[0].mxu0
        %v596 = vadd.f32 %v522, %v595
        %v597 = vpop.f32.mrb[0].mxu0
        %598 = vmatprep.mubr.f32.mxu0 0.0
        %599 = vmatmul.mubr.f32.gmra.mrb[0].mxu0 %v516
        %v600 = vpop.f32.mrb[0].mxu0
        %v601 = vadd.f32 %v522, %v600
        %v602 = vpop.f32.mrb[0].mxu0
        %603 = vmatprep.mubr.f32.mxu0 0.0
        %604 = vmatmul.mubr.f32.gmra.mrb[0].mxu0 %v517
        %v605 = vpop.f32.mrb[0].mxu0
        %v606 = vadd.f32 %v522, %v605
        %v607 = vpop.f32.mrb[0].mxu0
        %608 = vdwg.mxu0
        %v609 = vmax.f32 %v591, 0.0
        %v610 = vmax.f32 %v596, 0.0
        %v611 = vmax.f32 %v601, 0.0
        %v612 = vmax.f32 %v606, 0.0
        %v613 = vsub.f32 0.0, %v609
        %v614 = vsub.f32 0.0, %v610
        %v615 = vsub.f32 0.0, %v611
        %v616 = vsub.f32 0.0, %v612
        %v617 = vmul.f32 %v613, 1.442695
        %v618 = vpow.pop %v617
        %v619 = vmul.f32 %v614, 1.442695
        %v620 = vpow.pop %v619
        %v621 = vmul.f32 %v615, 1.442695
        %v622 = vpow.pop %v621
        %v623 = vmul.f32 %v616, 1.442695
        %v624 = vpow.pop %v623
        %v625 = vadd.f32 %v618, 1.0
        %v626 = vadd.f32 %v620, 1.0
        %v627 = vadd.f32 %v622, 1.0
        %v628 = vadd.f32 %v624, 1.0
        %v629 = vrcp.pop %v625
        %v630 = vrcp.pop %v626
        %v631 = vrcp.pop %v627
        %v632 = vrcp.pop %v628
        %633 = vst [vmem:[%s274] sm:$0xff] %v629
        %634 = vst [vmem:[%s274 + $0x8] sm:$0xff] %v630
        %635 = vst [vmem:[%s274 + $0x10] sm:$0xff] %v631
        %636 = vst [vmem:[%s274 + $0x18] sm:$0xff] %v632
        %s637 = sand.u32 %s161, 1
        %s638 = scalar_lea.sflag [#allocation4], %s637
        %s639 = sand.u32 %s161, 1
        %s640 = smul.addr %s639, 32
        %s641 = scalar_lea.vmem [#allocation7], %s640
        // Predicated region
        $region53: #{tpu_custom_call.1} parent=43 // pred_check
          %p642 = pneg %p171
        $region54: #{tpu_custom_call.1} parent=43 // pred_check_branch
          %644 = sbr.rel (%p642) target = $region56
        $region55: #{tpu_custom_call.1} parent=43 // pred_region
          %s646 = ssub.s32 512, 512
          %647 = vsyncadd %s638, %s646
          %s648 = smul.addr %s22, 4
          %s649 = smul.addr %s648, 128
          %s650 = scalar_lea.hbm %s6, %s649
          %s651 = sshll.u32 %s641, 4
          %s652 = int_to_ptr.vmem [resolvable:$true] %s651
          %657 = dma.vmem_to_hbm [thread:$0]  %s652, 512, %s650, %s638, 128, 128, 8
        $region56: #{tpu_custom_call.1} parent=43 // pred_fallthru
          _
      $region44: #{tpu_custom_call.1} parent=5 // pred_fallthru
        _
      %p658 = scmp.le.s32.totalorder 2, %s17
      // Predicated region
      $region57: #{tpu_custom_call.1} parent=5 // pred_check
        %p659 = pneg %p658
      $region58: #{tpu_custom_call.1} parent=5 // pred_check_branch
        %661 = sbr.rel (%p659) target = $region60
      $region59: #{tpu_custom_call.1} parent=5 // pred_region
        %s662 = ssub.s32 %s17, 2
        // Predicated region
        $region61: #{tpu_custom_call.1} parent=59 // pred_check
          %p663 = pneg %p177
        $region62: #{tpu_custom_call.1} parent=59 // pred_check_branch
          %665 = sbr.rel (%p663) target = $region64
        $region63: #{tpu_custom_call.1} parent=59 // pred_region
          %s666 = sand.u32 %s162, 1
          %s667 = scalar_lea.sflag [#allocation4], %s666
          %s668 = sand.u32 %s162, 1
          %s669 = smul.addr %s668, 32
          %s670 = scalar_lea.vmem [#allocation7], %s669
          %671 = dma.done %s667, 512
        $region64: #{tpu_custom_call.1} parent=59 // pred_fallthru
          _
      $region60: #{tpu_custom_call.1} parent=5 // pred_fallthru
        _
    $region6: #{tpu_custom_call.1} parent=1 // loop_footer
      %s21 = sadd.s32 1, %s17
    $region7: #{tpu_custom_call.1} parent=1 // loop_footer_branch
      %16 = sbr.rel target = $region3
    $region8: #{tpu_custom_call.1} parent=1 // loop_exit
      _
    %672 = vsyncpa [#allocation3], 1
    %s673 = scalar_lea.sflag [#allocation3], 1
    %674 = vsyncpa %s673, 1
    %675 = vsyncpa [#allocation6], 1
    %676 = vsyncpa [#allocation4], 1
    %s677 = scalar_lea.sflag [#allocation4], 1
    %678 = vsyncpa %s677, 1

</llo_original>
